<compile_context>
chip_gen: v7x
topology: tpu7x:2x2x1
jax: 0.10.0
libtpu: 0.0.40
codegen_flags: <defaults>
</compile_context>

<pallas_src>
import jax
import jax.numpy as jnp
from jax.experimental import pallas as pl
from jax.experimental.pallas import tpu as pltpu


def _round_up(x, m):
    return ((x + m - 1) // m) * m


# ---------------- avg_pool2d(kernel_size=2, stride=2, padding=0) ----------------

def _avgpool_kernel(x_ref, p_ref, o_ref):
    # (TM, H*W) @ (H*W, Ho*Wo) -> (TM, Ho*Wo); the 0.25 scale is folded into P.
    o_ref[...] = jnp.dot(
        x_ref[...], p_ref[...], preferred_element_type=jnp.float32
    ).astype(o_ref.dtype)


@jax.jit
def avg_pool2d_2x2(x):
    """x: (N, C, H, W) float32 with even H, W. Returns (N, C, H//2, W//2)."""
    N, C, H, W = x.shape
    Ho, Wo = H // 2, W // 2
    NC, HW, HoWo = N * C, H * W, Ho * Wo
    xr = x.reshape(NC, HW)  # free reshape (contiguous NCHW)

    # Constant Kronecker pooling matrix (glue):
    # P[h*W + w, ho*Wo + wo] = 0.25 for h in {2ho, 2ho+1}, w in {2wo, 2wo+1}.
    ho = jnp.arange(Ho)
    wo = jnp.arange(Wo)
    col = (ho[:, None] * Wo + wo[None, :]).reshape(-1)
    P = jnp.zeros((HW, HoWo), jnp.float32)
    for dh in range(2):
        for dw in range(2):
            row = ((2 * ho[:, None] + dh) * W + (2 * wo[None, :] + dw)).reshape(-1)
            P = P.at[row, col].set(0.25)

    # VMEM-budgeted row-block size: double-buffered x/out blocks + resident P.
    # TODO(synk): for very large H*W (P > ~8 MiB) switch to a band-tiled NHWC
    #             VPU-add formulation instead of a resident pooling matrix.
    if NC <= 8:
        tm = NC
    else:
        p_bytes = HW * HoWo * 4
        budget = 24 * 1024 * 1024 - 2 * p_bytes
        row_bytes = 2 * (HW + HoWo) * 4
        tm = max(8, min(budget // row_bytes if budget > 0 else 8,
                        2048, (NC // 8) * 8))
        tm = (tm // 8) * 8
    grid = (pl.cdiv(NC, tm),)  # partial last block is masked on store

    out = pl.pallas_call(
        _avgpool_kernel,
        out_shape=jax.ShapeDtypeStruct((NC, HoWo), x.dtype),
        grid_spec=pltpu.PrefetchScalarGridSpec(
            num_scalar_prefetch=0,
            grid=grid,
            in_specs=[
                pl.BlockSpec((tm, HW), lambda i: (i, 0)),
                pl.BlockSpec((HW, HoWo), lambda i: (0, 0)),
            ],
            out_specs=pl.BlockSpec((tm, HoWo), lambda i: (i, 0)),
        ),
        compiler_params=pltpu.CompilerParams(
            dimension_semantics=("parallel",),
            vmem_limit_bytes=32 * 1024 * 1024,
        ),
    )(xr, P)
    return out.reshape(N, C, Ho, Wo)


# ---------------- Conv2dSame(3x3, stride=2) via im2col + tiled Pallas matmul ----------------

def _matmul_bias_kernel(p_ref, w_ref, b_ref, o_ref, acc_ref):
    k = pl.program_id(2)

    @pl.when(k == 0)
    def _():
        acc_ref[...] = jnp.zeros_like(acc_ref)

    acc_ref[...] += jnp.dot(
        p_ref[...], w_ref[...], preferred_element_type=jnp.float32
    )

    @pl.when(k == pl.num_programs(2) - 1)
    def _():
        o_ref[...] = (acc_ref[...] + b_ref[...]).astype(o_ref.dtype)


@jax.jit
def conv3x3_same_stride2(x, weight, bias):
    """x: (N, Cin, H, W); weight: (Cout, Cin, 3, 3); bias: (Cout,).
    Reproduces Conv2dSame(kernel=3, stride=2, dilation=1) 'same' padding.
    Inputs are fed to the MXU in bfloat16 with float32 accumulation."""
    N, C, H, W = x.shape
    Cout = weight.shape[0]
    k, s = 3, 2
    Ho = -(-H // s)
    Wo = -(-W // s)
    pad_h = max((Ho - 1) * s + k - H, 0)
    pad_w = max((Wo - 1) * s + k - W, 0)
    xp = jnp.pad(
        x.astype(jnp.bfloat16),
        ((0, 0), (0, 0),
         (pad_h // 2, pad_h - pad_h // 2),
         (pad_w // 2, pad_w - pad_w // 2)),
    )

    # im2col (glue): feature order (Cin, kh, kw) to match PyTorch weight layout.
    # TODO(synk): build patches in-kernel (halo DMA over input row bands) to
    #             eliminate this 9x-expanded HBM round-trip entirely.
    cols = []
    for kh in range(k):
        for kw in range(k):
            cols.append(xp[:, :, kh:kh + s * (Ho - 1) + 1:s,
                               kw:kw + s * (Wo - 1) + 1:s])          # (N, C, Ho, Wo)
    patches = jnp.stack(cols, axis=2)                                 # (N, C, 9, Ho, Wo)
    patches = patches.transpose(0, 3, 4, 1, 2).reshape(N * Ho * Wo, C * k * k)

    M, K = patches.shape

    # Pad K and Cout to multiples of 128 for lane-dense, MXU-aligned tiles.
    Kp = _round_up(K, 128)
    Coutp = _round_up(Cout, 128)
    tk = 256 if Kp % 256 == 0 else 128
    tn = 256 if Coutp % 256 == 0 else 128
    tm = min(512, (M // 8) * 8) if M >= 8 else M

    patches = jnp.pad(patches, ((0, 0), (0, Kp - K)))
    w_mat = weight.reshape(Cout, K).T.astype(jnp.bfloat16)            # (K, Cout)
    w_mat = jnp.pad(w_mat, ((0, Kp - K), (0, Coutp - Cout)))
    b_mat = jnp.pad(bias.astype(jnp.float32).reshape(1, Cout),
                    ((0, 0), (0, Coutp - Cout)))

    grid = (pl.cdiv(M, tm), Coutp // tn, Kp // tk)

    out = pl.pallas_call(
        _matmul_bias_kernel,
        out_shape=jax.ShapeDtypeStruct((M, Coutp), jnp.float32),
        grid_spec=pltpu.PrefetchScalarGridSpec(
            num_scalar_prefetch=0,
            grid=grid,
            in_specs=[
                pl.BlockSpec((tm, tk), lambda i, j, kk: (i, kk)),
                pl.BlockSpec((tk, tn), lambda i, j, kk: (kk, j)),
                pl.BlockSpec((1, tn), lambda i, j, kk: (0, j)),
            ],
            out_specs=pl.BlockSpec((tm, tn), lambda i, j, kk: (i, j)),
            scratch_shapes=[pltpu.VMEM((tm, tn), jnp.float32)],
        ),
        compiler_params=pltpu.CompilerParams(
            dimension_semantics=("parallel", "parallel", "arbitrary"),
            vmem_limit_bytes=32 * 1024 * 1024,
        ),
    )(patches, w_mat, b_mat)

    out = out[:, :Cout]
    # NHWC -> NCHW to preserve the PyTorch module's output layout.
    return out.reshape(N, Ho, Wo, Cout).transpose(0, 3, 1, 2).astype(x.dtype)


# ---------------- Downsample module ----------------

class Downsample:
    def __init__(self, channels, with_conv=False, key=None):
        self.with_conv = with_conv
        if with_conv:
            if key is None:
                key = jax.random.PRNGKey(0)
            k1, k2 = jax.random.split(key)
            fan_in = channels * 9
            bound = 1.0 / jnp.sqrt(jnp.float32(fan_in))
            # deterministic synthetic init (PyTorch-style uniform fan-in bound)
            self.weight = jax.random.uniform(
                k1, (channels, channels, 3, 3), jnp.float32, -bound, bound)
            self.bias = jax.random.uniform(
                k2, (channels,), jnp.float32, -bound, bound)

    def __call__(self, x):
        if self.with_conv:
            return conv3x3_same_stride2(x, self.weight, self.bias)
        return avg_pool2d_2x2(x)


if __name__ == "__main__":
    key = jax.random.PRNGKey(0)
    kx, kp = jax.random.split(key)
    N, C, H, W = 2, 4, 16, 16
    x = jax.random.normal(kx, (N, C, H, W), jnp.float32)

    # --- with_conv=False path: avg_pool2d(2, 2) ---
    down_pool = Downsample(C, with_conv=False)
    y_pool = jax.block_until_ready(down_pool(x))
    ref_pool = x.reshape(N, C, H // 2, 2, W // 2, 2).mean(axis=(3, 5))
    assert y_pool.shape == (N, C, H // 2, W // 2)
    assert jnp.allclose(y_pool, ref_pool, atol=1e-5, rtol=1e-5), (
        float(jnp.max(jnp.abs(y_pool - ref_pool))))

    # --- with_conv=True path: Conv2dSame(3x3, stride=2) ---
    down_conv = Downsample(C, with_conv=True, key=kp)
    y_conv = jax.block_until_ready(down_conv(x))
    # Reference uses the same bf16 input quantization as the kernel (f32 accumulate).
    x_q = x.astype(jnp.bfloat16).astype(jnp.float32)
    w_q = down_conv.weight.astype(jnp.bfloat16).astype(jnp.float32)
    ref_conv = jax.lax.conv_general_dilated(
        x_q, w_q, window_strides=(2, 2),
        padding=((0, 1), (0, 1)),  # TF-'same' split for H=W=16, k=3, s=2
        dimension_numbers=("NCHW", "OIHW", "NCHW"),
        precision=jax.lax.Precision.HIGHEST,
    ) + down_conv.bias.reshape(1, C, 1, 1)
    assert y_conv.shape == (N, C, H // 2, W // 2)
    assert jnp.allclose(y_conv, ref_conv, atol=1e-3, rtol=1e-3), (
        float(jnp.max(jnp.abs(y_conv - ref_conv))))

    print("KERNEL_OK")
</pallas_src>

<mosaic_0001>
module attributes {stable_mosaic.version = 11 : i64} {
  func.func @_avgpool_kernel(%arg0: i32, %arg1: memref<8x256xf32, #tpu.memory_space<vmem>>, %arg2: memref<256x64xf32, #tpu.memory_space<vmem>>, %arg3: memref<8x64xf32, #tpu.memory_space<vmem>>) attributes {dimension_semantics = [#tpu.dimension_semantics<parallel>], iteration_bounds = array<i64: 1>, scalar_prefetch = 0 : i64, scratch_operands = 0 : i64, tpu.core_type = #tpu.core_type<tc>, window_params = [{transform_indices = @transform_0, window_bounds = array<i64: 8, 256>}, {pipeline_mode = #tpu.pipeline_mode<synchronous>, transform_indices = @transform_1, window_bounds = array<i64: 256, 64>}, {transform_indices = @transform_2, window_bounds = array<i64: 8, 64>}]} {
    %c0 = arith.constant 0 : index
    %c0_0 = arith.constant 0 : index
    %0 = vector.load %arg1[%c0, %c0_0] : memref<8x256xf32, #tpu.memory_space<vmem>>, vector<8x256xf32>
    %c0_1 = arith.constant 0 : index
    %c0_2 = arith.constant 0 : index
    %1 = vector.load %arg2[%c0_1, %c0_2] : memref<256x64xf32, #tpu.memory_space<vmem>>, vector<256x64xf32>
    %cst = arith.constant dense<0.000000e+00> : vector<8x64xf32>
    %2 = tpu.matmul %0, %1, %cst {dimension_numbers = #tpu.dot_dimension_numbers<[1], [0], [0], [1], [0, 0, 1, 1], [], []>} : vector<8x256xf32>, vector<256x64xf32>, vector<8x64xf32> -> vector<8x64xf32>
    %c0_3 = arith.constant 0 : index
    %c0_4 = arith.constant 0 : index
    %3 = vector.load %arg3[%c0_3, %c0_4] : memref<8x64xf32, #tpu.memory_space<vmem>>, vector<8x64xf32>
    tpu.vector_store %arg3[%c0_3, %c0_4], %2 {strides = array<i32>} : memref<8x64xf32, #tpu.memory_space<vmem>>, vector<8x64xf32>,
    return
  }
  func.func @transform_0(%arg0: i32) -> (i32, i32) {
    %c0_i32 = arith.constant 0 : i32
    %c0_i32_0 = arith.constant 0 : i32
    return %arg0, %c0_i32 : i32, i32
  }
  func.func @transform_1(%arg0: i32) -> (i32, i32) {
    %c0_i32 = arith.constant 0 : i32
    %c0_i32_0 = arith.constant 0 : i32
    %c0_i32_1 = arith.constant 0 : i32
    return %c0_i32, %c0_i32_0 : i32, i32
  }
  func.func @transform_2(%arg0: i32) -> (i32, i32) {
    %c0_i32 = arith.constant 0 : i32
    %c0_i32_0 = arith.constant 0 : i32
    return %arg0, %c0_i32 : i32, i32
  }
}

</mosaic_0001>

<llo_original>
// kernel: avg_pool2d_2x2.1
$region0: #{avg_pool2d_2x2.1}
  #allocation0 [shape = 'u32[]', space=smem, size = 0x4, offset = 0x4, fixed_abs, tag = 'smem constant byte address 0x4 - core index']
  #allocation1 [shape = 'u32[144,128]{1,0:T(1,128)}', space=vmem, size = 0x12000, scoped, tag = 'internal scratch']
  %s0 = inlined_call_operand.vmem [shape: f32[8,256], index: 0, kind: input, shape index: {}]
  %s1 = inlined_call_operand.vmem [shape: f32[256,64], index: 1, kind: input, shape index: {}]
  %s2 = inlined_call_operand.vmem [shape: f32[8,64], index: 2, kind: output, shape index: {}]
  %s3 = sld [smem:[#allocation0]]
  $region18: #{avg_pool2d_2x2.1} parent=0
    _
  %s5 = ssub.s32 1, %s3
  %s6 = scalar_select 0, %s5, %s3
  // Predicated region
  $region2: #{avg_pool2d_2x2.1} parent=0 // pred_check
    _
  $region3: #{avg_pool2d_2x2.1} parent=0 // pred_check_branch
    %8 = sbr.rel (0) target = $region5
  $region4: #{avg_pool2d_2x2.1} parent=0 // pred_region
    _
  $region5: #{avg_pool2d_2x2.1} parent=0 // pred_fallthru
    _
  // Predicated region
  $region6: #{avg_pool2d_2x2.1} parent=0 // pred_check
    _
  $region7: #{avg_pool2d_2x2.1} parent=0 // pred_check_branch
    %10 = sbr.rel (0) target = $region9
  $region8: #{avg_pool2d_2x2.1} parent=0 // pred_region
    _
  $region9: #{avg_pool2d_2x2.1} parent=0 // pred_fallthru
    _
  %v11 = vld [vmem:[%s0] sm:$0xff]
  %v12 = vld [vmem:[%s0 + $0x8] sm:$0xff]
  %v13 = vld [vmem:[%s1] sm:$0xff]
  %v14 = vld [vmem:[%s1 + $0x8] sm:$0xff]
  %v15 = vld [vmem:[%s1 + $0x10] sm:$0xff]
  %v16 = vld [vmem:[%s1 + $0x18] sm:$0xff]
  %v17 = vld [vmem:[%s1 + $0x20] sm:$0xff]
  %v18 = vld [vmem:[%s1 + $0x28] sm:$0xff]
  %v19 = vld [vmem:[%s1 + $0x30] sm:$0xff]
  %v20 = vld [vmem:[%s1 + $0x38] sm:$0xff]
  %v21 = vld [vmem:[%s1 + $0x40] sm:$0xff]
  %v22 = vld [vmem:[%s1 + $0x48] sm:$0xff]
  %v23 = vld [vmem:[%s1 + $0x50] sm:$0xff]
  %v24 = vld [vmem:[%s1 + $0x58] sm:$0xff]
  %v25 = vld [vmem:[%s1 + $0x60] sm:$0xff]
  %v26 = vld [vmem:[%s1 + $0x68] sm:$0xff]
  %v27 = vld [vmem:[%s1 + $0x70] sm:$0xff]
  %v28 = vld [vmem:[%s1 + $0x78] sm:$0xff]
  %v29 = vld [vmem:[%s1 + $0x80] sm:$0xff]
  %v30 = vld [vmem:[%s1 + $0x88] sm:$0xff]
  %v31 = vld [vmem:[%s1 + $0x90] sm:$0xff]
  %v32 = vld [vmem:[%s1 + $0x98] sm:$0xff]
  %v33 = vld [vmem:[%s1 + $0xa0] sm:$0xff]
  %v34 = vld [vmem:[%s1 + $0xa8] sm:$0xff]
  %v35 = vld [vmem:[%s1 + $0xb0] sm:$0xff]
  %v36 = vld [vmem:[%s1 + $0xb8] sm:$0xff]
  %v37 = vld [vmem:[%s1 + $0xc0] sm:$0xff]
  %v38 = vld [vmem:[%s1 + $0xc8] sm:$0xff]
  %v39 = vld [vmem:[%s1 + $0xd0] sm:$0xff]
  %v40 = vld [vmem:[%s1 + $0xd8] sm:$0xff]
  %v41 = vld [vmem:[%s1 + $0xe0] sm:$0xff]
  %v42 = vld [vmem:[%s1 + $0xe8] sm:$0xff]
  %v43 = vld [vmem:[%s1 + $0xf0] sm:$0xff]
  %v44 = vld [vmem:[%s1 + $0xf8] sm:$0xff]
  %45 = vmatprep.subr.mxu0 0.0
  %46 = vmatpush1.msra.mxu0 %v13
  %47 = vmatprep.subr.mxu0 0.0
  %48 = vmatpush1.msra.mxu0 %v14
  %49 = vmatprep.subr.mxu0 0.0
  %50 = vmatpush1.msra.mxu0 %v15
  %51 = vmatprep.subr.mxu0 0.0
  %52 = vmatpush1.msra.mxu0 %v16
  %53 = vmatprep.subr.mxu0 0.0
  %54 = vmatpush1.msra.mxu0 %v17
  %55 = vmatprep.subr.mxu0 0.0
  %56 = vmatpush1.msra.mxu0 %v18
  %57 = vmatprep.subr.mxu0 0.0
  %58 = vmatpush1.msra.mxu0 %v19
  %59 = vmatprep.subr.mxu0 0.0
  %60 = vmatpush1.msra.mxu0 %v20
  %61 = vmatprep.subr.mxu0 0.0
  %62 = vmatpush1.msra.mxu0 %v21
  %63 = vmatprep.subr.mxu0 0.0
  %64 = vmatpush1.msra.mxu0 %v22
  %65 = vmatprep.subr.mxu0 0.0
  %66 = vmatpush1.msra.mxu0 %v23
  %67 = vmatprep.subr.mxu0 0.0
  %68 = vmatpush1.msra.mxu0 %v24
  %69 = vmatprep.subr.mxu0 0.0
  %70 = vmatpush1.msra.mxu0 %v25
  %71 = vmatprep.subr.mxu0 0.0
  %72 = vmatpush1.msra.mxu0 %v26
  %73 = vmatprep.subr.mxu0 0.0
  %74 = vmatpush1.msra.mxu0 %v27
  %75 = vmatprep.subr.mxu0 0.0
  %76 = vmatpush1.msra.mxu0 %v28
  %77 = vmatprep.subr.mxu0 0.0
  %78 = vmatpush1.msra.mxu0 %v29
  %79 = vmatprep.subr.mxu0 0.0
  %80 = vmatpush1.msra.mxu0 %v30
  %81 = vmatprep.subr.mxu0 0.0
  %82 = vmatpush1.msra.mxu0 %v31
  %83 = vmatprep.subr.mxu0 0.0
  %84 = vmatpush1.msra.mxu0 %v32
  %85 = vmatprep.subr.mxu0 0.0
  %86 = vmatpush1.msra.mxu0 %v33
  %87 = vmatprep.subr.mxu0 0.0
  %88 = vmatpush1.msra.mxu0 %v34
  %89 = vmatprep.subr.mxu0 0.0
  %90 = vmatpush1.msra.mxu0 %v35
  %91 = vmatprep.subr.mxu0 0.0
  %92 = vmatpush1.msra.mxu0 %v36
  %93 = vmatprep.subr.mxu0 0.0
  %94 = vmatpush1.msra.mxu0 %v37
  %95 = vmatprep.subr.mxu0 0.0
  %96 = vmatpush1.msra.mxu0 %v38
  %97 = vmatprep.subr.mxu0 0.0
  %98 = vmatpush1.msra.mxu0 %v39
  %99 = vmatprep.subr.mxu0 0.0
  %100 = vmatpush1.msra.mxu0 %v40
  %101 = vmatprep.subr.mxu0 0.0
  %102 = vmatpush1.msra.mxu0 %v41
  %103 = vmatprep.subr.mxu0 0.0
  %104 = vmatpush1.msra.mxu0 %v42
  %105 = vmatprep.subr.mxu0 0.0
  %106 = vmatpush1.msra.mxu0 %v43
  %107 = vmatprep.subr.mxu0 0.0
  %108 = vmatpush1.msra.mxu0 %v44
  %109 = vmatprep.mubr.f32.mxu0 %v12
  %110 = vmatmul.mubr.f32.gmra.mrb[0].mxu0 %v11
  %v111 = vpop.f32.mrb[0].mxu0
  %v112 = vadd.f32 0.0, %v111
  %v113 = vpop.f32.mrb[0].mxu0
  %114 = vdwg.mxu0
  %vm115 = vcmask 523264
  %116 = vst.msk [vmem:[%s2] sm:$0xff] %vm115, %v112
  // Predicated region
  $region10: #{avg_pool2d_2x2.1} parent=0 // pred_check
    _
  $region11: #{avg_pool2d_2x2.1} parent=0 // pred_check_branch
    %118 = sbr.rel (0) target = $region13
  $region12: #{avg_pool2d_2x2.1} parent=0 // pred_region
    _
  $region13: #{avg_pool2d_2x2.1} parent=0 // pred_fallthru
    _
  // Predicated region
  $region14: #{avg_pool2d_2x2.1} parent=0 // pred_check
    _
  $region15: #{avg_pool2d_2x2.1} parent=0 // pred_check_branch
    %120 = sbr.rel (0) target = $region17
  $region16: #{avg_pool2d_2x2.1} parent=0 // pred_region
    _
  $region17: #{avg_pool2d_2x2.1} parent=0 // pred_fallthru
    _

</llo_original>
